<compile_context>
chip_gen: v7x
topology: tpu7x:2x2x1
jax: 0.10.0
libtpu: 0.0.40
codegen_flags: <defaults>
</compile_context>

<pallas_src>
import functools

import numpy as np

import jax
import jax.numpy as jnp
from jax import lax
from jax.experimental import pallas as pl
from jax.experimental.pallas import tpu as pltpu

_BN_EPS = 1e-5


def _round_up(v, m):
    return ((v + m - 1) // m) * m


def _vmem_budget_bytes():
    """Per-generation VMEM budget (explicit, generation-aware limits)."""
    kind = ""
    try:
        kind = jax.devices()[0].device_kind.lower()
    except Exception:
        pass
    if "v7" in kind or "tpu7" in kind or "7x" in kind:
        return 48 * 1024 * 1024          # v7x: 64 MiB physical per TensorCore
    return 96 * 1024 * 1024              # v5e / v6e: 128 MiB physical


def _pick_tile_rows(H, W, cin_p, cout_p, c_skip, n_cat,
                    x_bytes, mm_bytes, conv_bytes, out_bytes, budget):
    """Largest whole-row spatial tile whose double-buffered working set fits budget.

    Constraint: tile_hw = tile_rows * W must be a multiple of 128 (lane tiling of
    the conv/skip/out blocks) unless the tile covers the whole image.
    """
    halo = W + 1
    valid = [tr for tr in range(1, H + 1)
             if H % tr == 0 and (tr == H or (tr * W) % 128 == 0)]
    valid.sort(reverse=True)
    chosen = valid[-1]                    # smallest legal tile as a fallback
    for tr in valid:
        thw = tr * W
        win = thw + 2 * halo
        need1 = (2 * cin_p * win * x_bytes            # x window (double-buffered)
                 + 9 * cin_p * thw * mm_bytes         # im2col scratch
                 + 2 * cout_p * thw * conv_bytes      # conv tile (double-buffered)
                 + cout_p * thw * 4                   # f32 accumulator value
                 + 2 * cout_p * 9 * cin_p * mm_bytes  # weights
                 + 2 * 2 * thw * x_bytes)             # column masks
        need2 = (2 * cout_p * thw * conv_bytes
                 + 2 * c_skip * thw * x_bytes
                 + 2 * n_cat * thw * out_bytes
                 + cout_p * thw * 4)
        if max(need1, need2) + (1 << 20) <= budget:
            chosen = tr
            break
    return chosen


def _conv_stats_kernel(x_ref, w_ref, mask_ref, conv_ref, stats_ref, lhs_ref, *,
                       img_w, halo):
    """3x3 'same' conv (== ConvTranspose2d(k=3,s=1,p=1)) on one spatial tile plus
    per-(image, tile) BatchNorm partial statistics.

    x_ref    : (1, 1, Cin_p, win)    tile window of the zero-padded flattened image
                                     (win = tile_hw + 2*(W+1): row halo baked in)
    w_ref    : (Cout_p, 9*Cin_p)     conv weight, taps*channels folded into K
    mask_ref : (2, tile_hw)          column-validity masks (has-left / has-right)
    conv_ref : (1, Cout_p, tile_hw)  conv output tile (conv_dtype)
    stats_ref: (1, 1, Cout_p, 2)     per-channel [sum, sum-of-squares] of this tile
    lhs_ref  : (9*Cin_p, tile_hw)    VMEM scratch: im2col LHS (matmul dtype)
    """
    cin_p = x_ref.shape[2]
    tile_hw = conv_ref.shape[2]
    m_left = mask_ref[0:1, :]
    m_right = mask_ref[1:2, :]

    # Build the im2col LHS.  For tap (kh, kw) the value at tile-local output
    # position p is x_window[:, p + halo + (kh-1)*W + (kw-1)] -- a *static* lane
    # slice (no rolls, no dynamic offsets).  Vertical out-of-image taps read the
    # zero padding; horizontal ones are zeroed by the column masks.
    for kh in range(3):
        for kw in range(3):
            k = kh * 3 + kw
            start = halo + (kh - 1) * img_w + (kw - 1)
            sl = x_ref[0, 0, :, start:start + tile_hw]
            if kw == 0:
                sl = sl * m_left
            elif kw == 2:
                sl = sl * m_right
            lhs_ref[k * cin_p:(k + 1) * cin_p, :] = sl.astype(lhs_ref.dtype)

    # One MXU matmul with K = 9*Cin_p and lane-dense output width = tile_hw.
    # (v5e alternative for tiny Cout: accumulate nine K=Cin_p dots and skip this
    #  scratch to relieve the single vector-store slot.)
    conv = jnp.dot(w_ref[...], lhs_ref[...], preferred_element_type=jnp.float32)
    conv_ref[0] = conv.astype(conv_ref.dtype)

    # One-pass BN statistics from the f32 accumulator (before any downcast).
    stats_ref[0, 0, :, 0:1] = jnp.sum(conv, axis=1, keepdims=True)
    stats_ref[0, 0, :, 1:2] = jnp.sum(conv * conv, axis=1, keepdims=True)


def _bn_relu_concat_kernel(conv_ref, skip_ref, ss_ref, out_ref, *, n_out):
    """y = relu(conv*scale + shift); out tile = [y ; skip] along channels.

    conv_ref : (1, Cout_p, tile_hw)
    skip_ref : (1, Cskip, tile_hw)
    ss_ref   : (Cout_p, 2) f32: [:,0] = scale = gamma*rsqrt(var+eps),
                                [:,1] = shift = beta - mean*scale
    out_ref  : (1, Cout + Cskip, tile_hw)
    """
    scale = ss_ref[:, 0:1]
    shift = ss_ref[:, 1:2]
    y = conv_ref[0].astype(jnp.float32) * scale + shift
    y = jnp.maximum(y, 0.0)
    out_ref[0, :n_out, :] = y[:n_out, :].astype(out_ref.dtype)
    out_ref[0, n_out:, :] = skip_ref[0].astype(out_ref.dtype)


def _unet_up_forward(x_nchw, skip_nchw, w_ct, gamma, beta, *,
                     tile_rows=None, use_bf16_matmul=False, conv_dtype=None):
    """UNetUp forward.

    x_nchw   : (N, Cin, H, W)
    skip_nchw: (N, Cskip, H, W)
    w_ct     : (Cin, Cout, 3, 3)   PyTorch ConvTranspose2d weight
    gamma    : (Cout,)             BatchNorm2d weight
    beta     : (Cout,)             BatchNorm2d bias
    returns  : (N, Cout+Cskip, H, W)
    """
    N, Cin, H, W = x_nchw.shape
    Cout = w_ct.shape[1]
    Cskip = skip_nchw.shape[1]
    HW = H * W
    halo = W + 1
    cin_p = _round_up(Cin, 8)
    cout_p = _round_up(Cout, 8)
    n_cat = Cout + Cskip

    out_dtype = x_nchw.dtype
    if conv_dtype is None:
        conv_dtype = x_nchw.dtype        # bf16 inputs -> bf16 intermediate (half traffic)
    mm_dtype = jnp.bfloat16 if use_bf16_matmul else jnp.float32

    budget = _vmem_budget_bytes()
    x_bytes = x_nchw.dtype.itemsize
    mm_bytes = jnp.dtype(mm_dtype).itemsize
    conv_bytes = jnp.dtype(conv_dtype).itemsize
    if tile_rows is None:
        tile_rows = _pick_tile_rows(H, W, cin_p, cout_p, Cskip, n_cat,
                                    x_bytes, mm_bytes, conv_bytes, x_bytes, budget)
    if H % tile_rows != 0:
        raise ValueError(f"tile_rows={tile_rows} must divide H={H}")
    tile_hw = tile_rows * W
    if tile_hw != HW and tile_hw % 128 != 0:
        raise ValueError("tile_rows*W must be a multiple of 128 or cover the image")
    n_tiles = HW // tile_hw
    win = tile_hw + 2 * halo

    # ---- Wrapper-side prep: free reshapes + halo'd per-tile windows --------------
    x3 = x_nchw.reshape(N, Cin, HW)
    if cin_p != Cin:
        x3 = jnp.pad(x3, ((0, 0), (0, cin_p - Cin), (0, 0)))
    # Zero-pad W+1 columns on each side of the flattened spatial axis: vertical
    # out-of-image neighbours read zeros and every tile window is a legal slice.
    x_pad = jnp.pad(x3, ((0, 0), (0, 0), (halo, halo)))
    x_tiles = jnp.stack(
        [lax.slice_in_dim(x_pad, t * tile_hw, t * tile_hw + win, axis=2)
         for t in range(n_tiles)], axis=1)              # (N, n_tiles, Cin_p, win)

    skip3 = skip_nchw.reshape(N, Cskip, HW)

    # ConvTranspose2d(k=3, s=1, p=1) == 3x3 "same" conv with flipped kernel and
    # swapped in/out channels: Wconv[kh,kw,i,o] = Wct[i,o,2-kh,2-kw].
    w_conv = jnp.transpose(jnp.flip(w_ct, axis=(2, 3)), (2, 3, 0, 1))  # (3,3,Cin,Cout)
    w_conv = jnp.pad(w_conv, ((0, 0), (0, 0), (0, cin_p - Cin), (0, cout_p - Cout)))
    w_t = w_conv.reshape(9 * cin_p, cout_p).T.astype(mm_dtype)         # (Cout_p, 9*Cin_p)

    # Column-validity masks (independent of tile index since tiles are whole rows).
    col = np.arange(tile_hw, dtype=np.int64) % W
    masks = jnp.asarray(np.stack([(col > 0), (col < W - 1)]).astype(np.float32),
                        dtype=x_nchw.dtype)                            # (2, tile_hw)

    cparams = pltpu.CompilerParams(
        dimension_semantics=("parallel", "parallel"),
        vmem_limit_bytes=int(budget))

    # ---- Pass 1: conv + per-(image, tile) BN statistics --------------------------
    conv, stats = pl.pallas_call(
        functools.partial(_conv_stats_kernel, img_w=W, halo=halo),
        out_shape=(jax.ShapeDtypeStruct((N, cout_p, HW), conv_dtype),
                   jax.ShapeDtypeStruct((N, n_tiles, cout_p, 2), jnp.float32)),
        grid=(N, n_tiles),
        in_specs=[
            pl.BlockSpec((1, 1, cin_p, win), lambda n, t: (n, t, 0, 0)),
            pl.BlockSpec((cout_p, 9 * cin_p), lambda n, t: (0, 0)),
            pl.BlockSpec((2, tile_hw), lambda n, t: (0, 0)),
        ],
        out_specs=(
            pl.BlockSpec((1, cout_p, tile_hw), lambda n, t: (n, 0, t)),
            pl.BlockSpec((1, 1, cout_p, 2), lambda n, t: (n, t, 0, 0)),
        ),
        scratch_shapes=[pltpu.VMEM((9 * cin_p, tile_hw), mm_dtype)],
        compiler_params=cparams,
    )(x_tiles, w_t, masks)

    # ---- Tiny cross-tile/image reduction + BN folding (training-mode stats) ------
    cnt = jnp.float32(N * HW)
    s = jnp.sum(stats[..., 0], axis=(0, 1))
    sq = jnp.sum(stats[..., 1], axis=(0, 1))
    mean = s / cnt
    var = jnp.maximum(sq / cnt - mean * mean, 0.0)       # biased variance
    gamma_p = jnp.pad(gamma.astype(jnp.float32), (0, cout_p - Cout),
                      constant_values=1.0)
    beta_p = jnp.pad(beta.astype(jnp.float32), (0, cout_p - Cout))
    scale = gamma_p * lax.rsqrt(var + _BN_EPS)
    shift = beta_p - mean * scale
    scale_shift = jnp.stack([scale, shift], axis=1)      # (Cout_p, 2), one tiny DMA

    # ---- Pass 2: normalize + ReLU + channel-concat with skip ---------------------
    out3 = pl.pallas_call(
        functools.partial(_bn_relu_concat_kernel, n_out=Cout),
        out_shape=jax.ShapeDtypeStruct((N, n_cat, HW), out_dtype),
        grid=(N, n_tiles),
        in_specs=[
            pl.BlockSpec((1, cout_p, tile_hw), lambda n, t: (n, 0, t)),
            pl.BlockSpec((1, Cskip, tile_hw), lambda n, t: (n, 0, t)),
            pl.BlockSpec((cout_p, 2), lambda n, t: (0, 0)),
        ],
        out_specs=pl.BlockSpec((1, n_cat, tile_hw), lambda n, t: (n, 0, t)),
        compiler_params=cparams,
    )(conv, skip3, scale_shift)

    # (N, Cout+Cskip, H*W) -> (N, Cout+Cskip, H, W): free reshape, no transpose.
    return out3.reshape(N, n_cat, H, W)


unet_up_forward = jax.jit(
    _unet_up_forward,
    static_argnames=("tile_rows", "use_bf16_matmul", "conv_dtype"))


def _reference(x_nchw, skip_nchw, w_ct, gamma, beta):
    """Pure-JAX (XLA) reference for verification."""
    x = jnp.transpose(x_nchw, (0, 2, 3, 1))
    w_mat = jnp.transpose(jnp.flip(w_ct, axis=(2, 3)), (2, 3, 0, 1))
    conv = lax.conv_general_dilated(
        x, w_mat, window_strides=(1, 1), padding="SAME",
        dimension_numbers=("NHWC", "HWIO", "NHWC"))
    mean = jnp.mean(conv, axis=(0, 1, 2), keepdims=True)
    var = jnp.mean((conv - mean) ** 2, axis=(0, 1, 2), keepdims=True)
    y = (conv - mean) * lax.rsqrt(var + _BN_EPS) * gamma + beta
    y = jnp.maximum(y, 0.0)
    out = jnp.concatenate([y, jnp.transpose(skip_nchw, (0, 2, 3, 1))], axis=-1)
    return jnp.transpose(out, (0, 3, 1, 2))


if __name__ == "__main__":
    # Small deterministic setup: in_size=4, out_size=8, skip channels=8, 16x16 spatial.
    N, Cin, Cout, Cskip, H, W = 2, 4, 8, 8, 16, 16
    key = jax.random.PRNGKey(0)
    k1, k2, k3, k4, k5 = jax.random.split(key, 5)

    x = jax.random.normal(k1, (N, Cin, H, W), jnp.float32)
    skip = jax.random.normal(k2, (N, Cskip, H, W), jnp.float32)
    # ConvTranspose2d weight shape: (in_channels, out_channels, kH, kW)
    w_ct = jax.random.normal(k3, (Cin, Cout, 3, 3), jnp.float32) * 0.1
    gamma = 1.0 + 0.1 * jax.random.normal(k4, (Cout,), jnp.float32)
    beta = 0.1 * jax.random.normal(k5, (Cout,), jnp.float32)

    ref = jax.block_until_ready(_reference(x, skip, w_ct, gamma, beta))

    # Auto tile size (the whole 16x16 image fits comfortably -> single tile).
    out = jax.block_until_ready(unet_up_forward(x, skip, w_ct, gamma, beta))
    assert out.shape == (N, Cout + Cskip, H, W), out.shape
    assert jnp.allclose(out, ref, atol=1e-4, rtol=1e-4), float(
        jnp.max(jnp.abs(out - ref)))

    # Forced two-tile spatial split: explicitly exercises the halo'd tiled path.
    out_t = jax.block_until_ready(
        unet_up_forward(x, skip, w_ct, gamma, beta, tile_rows=8))
    assert jnp.allclose(out_t, ref, atol=1e-4, rtol=1e-4), float(
        jnp.max(jnp.abs(out_t - ref)))

    print("KERNEL_OK")
</pallas_src>

<mosaic_0001>
module attributes {stable_mosaic.version = 11 : i64} {
  func.func @_conv_stats_kernel(%arg0: i32, %arg1: i32, %arg2: memref<1x1x8x290xf32, #tpu.memory_space<vmem>>, %arg3: memref<8x72xf32, #tpu.memory_space<vmem>>, %arg4: memref<2x256xf32, #tpu.memory_space<vmem>>, %arg5: memref<1x8x256xf32, #tpu.memory_space<vmem>>, %arg6: memref<1x1x8x2xf32, #tpu.memory_space<vmem>>, %arg7: memref<72x256xf32, #tpu.memory_space<vmem>>) attributes {dimension_semantics = [#tpu.dimension_semantics<parallel>, #tpu.dimension_semantics<parallel>], iteration_bounds = array<i64: 2, 1>, scalar_prefetch = 0 : i64, scratch_operands = 1 : i64, tpu.core_type = #tpu.core_type<tc>, window_params = [{transform_indices = @transform_0, window_bounds = array<i64: 1, 1, 8, 290>}, {pipeline_mode = #tpu.pipeline_mode<synchronous>, transform_indices = @transform_1, window_bounds = array<i64: 8, 72>}, {pipeline_mode = #tpu.pipeline_mode<synchronous>, transform_indices = @transform_2, window_bounds = array<i64: 2, 256>}, {transform_indices = @transform_3, window_bounds = array<i64: 1, 8, 256>}, {transform_indices = @transform_4, window_bounds = array<i64: 1, 1, 8, 2>}]} {
    %c0 = arith.constant 0 : index
    %c0_0 = arith.constant 0 : index
    %0 = vector.load %arg4[%c0, %c0_0] : memref<2x256xf32, #tpu.memory_space<vmem>>, vector<1x256xf32>
    %c1 = arith.constant 1 : index
    %c0_1 = arith.constant 0 : index
    %1 = vector.load %arg4[%c1, %c0_1] : memref<2x256xf32, #tpu.memory_space<vmem>>, vector<1x256xf32>
    %c0_2 = arith.constant 0 : index
    %c0_3 = arith.constant 0 : index
    %c0_4 = arith.constant 0 : index
    %c0_5 = arith.constant 0 : index
    %2 = vector.load %arg2[%c0_2, %c0_3, %c0_4, %c0_5] : memref<1x1x8x290xf32, #tpu.memory_space<vmem>>, vector<1x1x8x256xf32>
    %3 = vector.shape_cast %2 : vector<1x1x8x256xf32> to vector<8x256xf32>
    %4 = vector.broadcast %0 : vector<1x256xf32> to vector<8x256xf32>
    %5 = arith.mulf %3, %4 : vector<8x256xf32>
    %c0_6 = arith.constant 0 : index
    %c0_7 = arith.constant 0 : index
    %6 = vector.load %arg7[%c0_6, %c0_7] : memref<72x256xf32, #tpu.memory_space<vmem>>, vector<8x256xf32>
    tpu.vector_store %arg7[%c0_6, %c0_7], %5 {strides = array<i32>} : memref<72x256xf32, #tpu.memory_space<vmem>>, vector<8x256xf32>,
    %c0_8 = arith.constant 0 : index
    %c0_9 = arith.constant 0 : index
    %c0_10 = arith.constant 0 : index
    %c1_11 = arith.constant 1 : index
    %7 = vector.load %arg2[%c0_8, %c0_9, %c0_10, %c1_11] : memref<1x1x8x290xf32, #tpu.memory_space<vmem>>, vector<1x1x8x256xf32>
    %8 = vector.shape_cast %7 : vector<1x1x8x256xf32> to vector<8x256xf32>
    %c8 = arith.constant 8 : index
    %c0_12 = arith.constant 0 : index
    %9 = vector.load %arg7[%c8, %c0_12] : memref<72x256xf32, #tpu.memory_space<vmem>>, vector<8x256xf32>
    tpu.vector_store %arg7[%c8, %c0_12], %8 {strides = array<i32>} : memref<72x256xf32, #tpu.memory_space<vmem>>, vector<8x256xf32>,
    %c0_13 = arith.constant 0 : index
    %c0_14 = arith.constant 0 : index
    %c0_15 = arith.constant 0 : index
    %c2 = arith.constant 2 : index
    %10 = vector.load %arg2[%c0_13, %c0_14, %c0_15, %c2] : memref<1x1x8x290xf32, #tpu.memory_space<vmem>>, vector<1x1x8x256xf32>
    %11 = vector.shape_cast %10 : vector<1x1x8x256xf32> to vector<8x256xf32>
    %12 = vector.broadcast %1 : vector<1x256xf32> to vector<8x256xf32>
    %13 = arith.mulf %11, %12 : vector<8x256xf32>
    %c16 = arith.constant 16 : index
    %c0_16 = arith.constant 0 : index
    %14 = vector.load %arg7[%c16, %c0_16] : memref<72x256xf32, #tpu.memory_space<vmem>>, vector<8x256xf32>
    tpu.vector_store %arg7[%c16, %c0_16], %13 {strides = array<i32>} : memref<72x256xf32, #tpu.memory_space<vmem>>, vector<8x256xf32>,
    %c0_17 = arith.constant 0 : index
    %c0_18 = arith.constant 0 : index
    %c0_19 = arith.constant 0 : index
    %c16_20 = arith.constant 16 : index
    %15 = vector.load %arg2[%c0_17, %c0_18, %c0_19, %c16_20] : memref<1x1x8x290xf32, #tpu.memory_space<vmem>>, vector<1x1x8x256xf32>
    %16 = vector.shape_cast %15 : vector<1x1x8x256xf32> to vector<8x256xf32>
    %17 = vector.broadcast %0 : vector<1x256xf32> to vector<8x256xf32>
    %18 = arith.mulf %16, %17 : vector<8x256xf32>
    %c24 = arith.constant 24 : index
    %c0_21 = arith.constant 0 : index
    %19 = vector.load %arg7[%c24, %c0_21] : memref<72x256xf32, #tpu.memory_space<vmem>>, vector<8x256xf32>
    tpu.vector_store %arg7[%c24, %c0_21], %18 {strides = array<i32>} : memref<72x256xf32, #tpu.memory_space<vmem>>, vector<8x256xf32>,
    %c0_22 = arith.constant 0 : index
    %c0_23 = arith.constant 0 : index
    %c0_24 = arith.constant 0 : index
    %c17 = arith.constant 17 : index
    %20 = vector.load %arg2[%c0_22, %c0_23, %c0_24, %c17] : memref<1x1x8x290xf32, #tpu.memory_space<vmem>>, vector<1x1x8x256xf32>
    %21 = vector.shape_cast %20 : vector<1x1x8x256xf32> to vector<8x256xf32>
    %c32 = arith.constant 32 : index
    %c0_25 = arith.constant 0 : index
    %22 = vector.load %arg7[%c32, %c0_25] : memref<72x256xf32, #tpu.memory_space<vmem>>, vector<8x256xf32>
    tpu.vector_store %arg7[%c32, %c0_25], %21 {strides = array<i32>} : memref<72x256xf32, #tpu.memory_space<vmem>>, vector<8x256xf32>,
    %c0_26 = arith.constant 0 : index
    %c0_27 = arith.constant 0 : index
    %c0_28 = arith.constant 0 : index
    %c18 = arith.constant 18 : index
    %23 = vector.load %arg2[%c0_26, %c0_27, %c0_28, %c18] : memref<1x1x8x290xf32, #tpu.memory_space<vmem>>, vector<1x1x8x256xf32>
    %24 = vector.shape_cast %23 : vector<1x1x8x256xf32> to vector<8x256xf32>
    %25 = vector.broadcast %1 : vector<1x256xf32> to vector<8x256xf32>
    %26 = arith.mulf %24, %25 : vector<8x256xf32>
    %c40 = arith.constant 40 : index
    %c0_29 = arith.constant 0 : index
    %27 = vector.load %arg7[%c40, %c0_29] : memref<72x256xf32, #tpu.memory_space<vmem>>, vector<8x256xf32>
    tpu.vector_store %arg7[%c40, %c0_29], %26 {strides = array<i32>} : memref<72x256xf32, #tpu.memory_space<vmem>>, vector<8x256xf32>,
    %c0_30 = arith.constant 0 : index
    %c0_31 = arith.constant 0 : index
    %c0_32 = arith.constant 0 : index
    %c32_33 = arith.constant 32 : index
    %28 = vector.load %arg2[%c0_30, %c0_31, %c0_32, %c32_33] : memref<1x1x8x290xf32, #tpu.memory_space<vmem>>, vector<1x1x8x256xf32>
    %29 = vector.shape_cast %28 : vector<1x1x8x256xf32> to vector<8x256xf32>
    %30 = vector.broadcast %0 : vector<1x256xf32> to vector<8x256xf32>
    %31 = arith.mulf %29, %30 : vector<8x256xf32>
    %c48 = arith.constant 48 : index
    %c0_34 = arith.constant 0 : index
    %32 = vector.load %arg7[%c48, %c0_34] : memref<72x256xf32, #tpu.memory_space<vmem>>, vector<8x256xf32>
    tpu.vector_store %arg7[%c48, %c0_34], %31 {strides = array<i32>} : memref<72x256xf32, #tpu.memory_space<vmem>>, vector<8x256xf32>,
    %c0_35 = arith.constant 0 : index
    %c0_36 = arith.constant 0 : index
    %c0_37 = arith.constant 0 : index
    %c33 = arith.constant 33 : index
    %33 = vector.load %arg2[%c0_35, %c0_36, %c0_37, %c33] : memref<1x1x8x290xf32, #tpu.memory_space<vmem>>, vector<1x1x8x256xf32>
    %34 = vector.shape_cast %33 : vector<1x1x8x256xf32> to vector<8x256xf32>
    %c56 = arith.constant 56 : index
    %c0_38 = arith.constant 0 : index
    %35 = vector.load %arg7[%c56, %c0_38] : memref<72x256xf32, #tpu.memory_space<vmem>>, vector<8x256xf32>
    tpu.vector_store %arg7[%c56, %c0_38], %34 {strides = array<i32>} : memref<72x256xf32, #tpu.memory_space<vmem>>, vector<8x256xf32>,
    %c0_39 = arith.constant 0 : index
    %c0_40 = arith.constant 0 : index
    %c0_41 = arith.constant 0 : index
    %c34 = arith.constant 34 : index
    %36 = vector.load %arg2[%c0_39, %c0_40, %c0_41, %c34] : memref<1x1x8x290xf32, #tpu.memory_space<vmem>>, vector<1x1x8x256xf32>
    %37 = vector.shape_cast %36 : vector<1x1x8x256xf32> to vector<8x256xf32>
    %38 = vector.broadcast %1 : vector<1x256xf32> to vector<8x256xf32>
    %39 = arith.mulf %37, %38 : vector<8x256xf32>
    %c64 = arith.constant 64 : index
    %c0_42 = arith.constant 0 : index
    %40 = vector.load %arg7[%c64, %c0_42] : memref<72x256xf32, #tpu.memory_space<vmem>>, vector<8x256xf32>
    tpu.vector_store %arg7[%c64, %c0_42], %39 {strides = array<i32>} : memref<72x256xf32, #tpu.memory_space<vmem>>, vector<8x256xf32>,
    %c0_43 = arith.constant 0 : index
    %c0_44 = arith.constant 0 : index
    %41 = vector.load %arg3[%c0_43, %c0_44] : memref<8x72xf32, #tpu.memory_space<vmem>>, vector<8x72xf32>
    %c0_45 = arith.constant 0 : index
    %c0_46 = arith.constant 0 : index
    %42 = vector.load %arg7[%c0_45, %c0_46] : memref<72x256xf32, #tpu.memory_space<vmem>>, vector<72x256xf32>
    %cst = arith.constant dense<0.000000e+00> : vector<8x256xf32>
    %43 = tpu.matmul %41, %42, %cst {dimension_numbers = #tpu.dot_dimension_numbers<[1], [0], [0], [1], [0, 0, 1, 1], [], []>} : vector<8x72xf32>, vector<72x256xf32>, vector<8x256xf32> -> vector<8x256xf32>
    %c0_47 = arith.constant 0 : index
    %c0_48 = arith.constant 0 : index
    %c0_49 = arith.constant 0 : index
    %44 = vector.load %arg5[%c0_47, %c0_48, %c0_49] : memref<1x8x256xf32, #tpu.memory_space<vmem>>, vector<1x8x256xf32>
    %45 = vector.shape_cast %44 : vector<1x8x256xf32> to vector<8x256xf32>
    %46 = vector.shape_cast %43 : vector<8x256xf32> to vector<1x8x256xf32>
    tpu.vector_store %arg5[%c0_47, %c0_48, %c0_49], %46 {strides = array<i32>} : memref<1x8x256xf32, #tpu.memory_space<vmem>>, vector<1x8x256xf32>,
    %cst_50 = arith.constant dense<0.000000e+00> : vector<8xf32>
    %47 = vector.multi_reduction <add>, %43, %cst_50 [1] : vector<8x256xf32> to vector<8xf32>
    %48 = vector.shape_cast %47 : vector<8xf32> to vector<8x1xf32>
    %c0_51 = arith.constant 0 : index
    %c0_52 = arith.constant 0 : index
    %c0_53 = arith.constant 0 : index
    %c0_54 = arith.constant 0 : index
    %49 = vector.load %arg6[%c0_51, %c0_52, %c0_53, %c0_54] : memref<1x1x8x2xf32, #tpu.memory_space<vmem>>, vector<1x1x8x1xf32>
    %50 = vector.shape_cast %49 : vector<1x1x8x1xf32> to vector<8x1xf32>
    %51 = vector.shape_cast %48 : vector<8x1xf32> to vector<1x1x8x1xf32>
    tpu.vector_store %arg6[%c0_51, %c0_52, %c0_53, %c0_54], %51 {strides = array<i32>} : memref<1x1x8x2xf32, #tpu.memory_space<vmem>>, vector<1x1x8x1xf32>,
    %52 = arith.mulf %43, %43 : vector<8x256xf32>
    %cst_55 = arith.constant dense<0.000000e+00> : vector<8xf32>
    %53 = vector.multi_reduction <add>, %52, %cst_55 [1] : vector<8x256xf32> to vector<8xf32>
    %54 = vector.shape_cast %53 : vector<8xf32> to vector<8x1xf32>
    %c0_56 = arith.constant 0 : index
    %c0_57 = arith.constant 0 : index
    %c0_58 = arith.constant 0 : index
    %c1_59 = arith.constant 1 : index
    %55 = vector.load %arg6[%c0_56, %c0_57, %c0_58, %c1_59] : memref<1x1x8x2xf32, #tpu.memory_space<vmem>>, vector<1x1x8x1xf32>
    %56 = vector.shape_cast %55 : vector<1x1x8x1xf32> to vector<8x1xf32>
    %57 = vector.shape_cast %54 : vector<8x1xf32> to vector<1x1x8x1xf32>
    tpu.vector_store %arg6[%c0_56, %c0_57, %c0_58, %c1_59], %57 {strides = array<i32>} : memref<1x1x8x2xf32, #tpu.memory_space<vmem>>, vector<1x1x8x1xf32>,
    return
  }
  func.func @transform_0(%arg0: i32, %arg1: i32) -> (i32, i32, i32, i32) {
    %c0_i32 = arith.constant 0 : i32
    %c0_i32_0 = arith.constant 0 : i32
    %c0_i32_1 = arith.constant 0 : i32
    return %arg0, %arg1, %c0_i32, %c0_i32_0 : i32, i32, i32, i32
  }
  func.func @transform_1(%arg0: i32, %arg1: i32) -> (i32, i32) {
    %c0_i32 = arith.constant 0 : i32
    %c0_i32_0 = arith.constant 0 : i32
    %c0_i32_1 = arith.constant 0 : i32
    return %c0_i32, %c0_i32_0 : i32, i32
  }
  func.func @transform_2(%arg0: i32, %arg1: i32) -> (i32, i32) {
    %c0_i32 = arith.constant 0 : i32
    %c0_i32_0 = arith.constant 0 : i32
    %c0_i32_1 = arith.constant 0 : i32
    return %c0_i32, %c0_i32_0 : i32, i32
  }
  func.func @transform_3(%arg0: i32, %arg1: i32) -> (i32, i32, i32) {
    %c0_i32 = arith.constant 0 : i32
    %c0_i32_0 = arith.constant 0 : i32
    return %arg0, %c0_i32, %arg1 : i32, i32, i32
  }
  func.func @transform_4(%arg0: i32, %arg1: i32) -> (i32, i32, i32, i32) {
    %c0_i32 = arith.constant 0 : i32
    %c0_i32_0 = arith.constant 0 : i32
    %c0_i32_1 = arith.constant 0 : i32
    return %arg0, %arg1, %c0_i32, %c0_i32_0 : i32, i32, i32, i32
  }
}

module attributes {stable_mosaic.version = 11 : i64} {
  func.func @_bn_relu_concat_kernel(%arg0: i32, %arg1: i32, %arg2: memref<1x8x256xf32, #tpu.memory_space<vmem>>, %arg3: memref<1x8x256xf32, #tpu.memory_space<vmem>>, %arg4: memref<8x2xf32, #tpu.memory_space<vmem>>, %arg5: memref<1x16x256xf32, #tpu.memory_space<vmem>>) attributes {dimension_semantics = [#tpu.dimension_semantics<parallel>, #tpu.dimension_semantics<parallel>], iteration_bounds = array<i64: 2, 1>, scalar_prefetch = 0 : i64, scratch_operands = 0 : i64, tpu.core_type = #tpu.core_type<tc>, window_params = [{transform_indices = @transform_0, window_bounds = array<i64: 1, 8, 256>}, {transform_indices = @transform_1, window_bounds = array<i64: 1, 8, 256>}, {pipeline_mode = #tpu.pipeline_mode<synchronous>, transform_indices = @transform_2, window_bounds = array<i64: 8, 2>}, {transform_indices = @transform_3, window_bounds = array<i64: 1, 16, 256>}]} {
    %c0 = arith.constant 0 : index
    %c0_0 = arith.constant 0 : index
    %0 = vector.load %arg4[%c0, %c0_0] : memref<8x2xf32, #tpu.memory_space<vmem>>, vector<8x1xf32>
    %c0_1 = arith.constant 0 : index
    %c1 = arith.constant 1 : index
    %1 = vector.load %arg4[%c0_1, %c1] : memref<8x2xf32, #tpu.memory_space<vmem>>, vector<8x1xf32>
    %c0_2 = arith.constant 0 : index
    %c0_3 = arith.constant 0 : index
    %c0_4 = arith.constant 0 : index
    %2 = vector.load %arg2[%c0_2, %c0_3, %c0_4] : memref<1x8x256xf32, #tpu.memory_space<vmem>>, vector<1x8x256xf32>
    %3 = vector.shape_cast %2 : vector<1x8x256xf32> to vector<8x256xf32>
    %4 = vector.broadcast %0 : vector<8x1xf32> to vector<8x256xf32>
    %5 = arith.mulf %3, %4 : vector<8x256xf32>
    %6 = vector.broadcast %1 : vector<8x1xf32> to vector<8x256xf32>
    %7 = arith.addf %5, %6 : vector<8x256xf32>
    %cst = arith.constant 0.000000e+00 : f32
    %8 = vector.broadcast %cst : f32 to vector<8x256xf32>
    %9 = arith.maximumf %7, %8 : vector<8x256xf32>
    %c0_5 = arith.constant 0 : index
    %c0_6 = arith.constant 0 : index
    %c0_7 = arith.constant 0 : index
    %10 = vector.load %arg5[%c0_5, %c0_6, %c0_7] : memref<1x16x256xf32, #tpu.memory_space<vmem>>, vector<1x8x256xf32>
    %11 = vector.shape_cast %10 : vector<1x8x256xf32> to vector<8x256xf32>
    %12 = vector.shape_cast %9 : vector<8x256xf32> to vector<1x8x256xf32>
    tpu.vector_store %arg5[%c0_5, %c0_6, %c0_7], %12 {strides = array<i32>} : memref<1x16x256xf32, #tpu.memory_space<vmem>>, vector<1x8x256xf32>,
    %c0_8 = arith.constant 0 : index
    %c0_9 = arith.constant 0 : index
    %c0_10 = arith.constant 0 : index
    %13 = vector.load %arg3[%c0_8, %c0_9, %c0_10] : memref<1x8x256xf32, #tpu.memory_space<vmem>>, vector<1x8x256xf32>
    %14 = vector.shape_cast %13 : vector<1x8x256xf32> to vector<8x256xf32>
    %c0_11 = arith.constant 0 : index
    %c8 = arith.constant 8 : index
    %c0_12 = arith.constant 0 : index
    %15 = vector.load %arg5[%c0_11, %c8, %c0_12] : memref<1x16x256xf32, #tpu.memory_space<vmem>>, vector<1x8x256xf32>
    %16 = vector.shape_cast %15 : vector<1x8x256xf32> to vector<8x256xf32>
    %17 = vector.shape_cast %14 : vector<8x256xf32> to vector<1x8x256xf32>
    tpu.vector_store %arg5[%c0_11, %c8, %c0_12], %17 {strides = array<i32>} : memref<1x16x256xf32, #tpu.memory_space<vmem>>, vector<1x8x256xf32>,
    return
  }
  func.func @transform_0(%arg0: i32, %arg1: i32) -> (i32, i32, i32) {
    %c0_i32 = arith.constant 0 : i32
    %c0_i32_0 = arith.constant 0 : i32
    return %arg0, %c0_i32, %arg1 : i32, i32, i32
  }
  func.func @transform_1(%arg0: i32, %arg1: i32) -> (i32, i32, i32) {
    %c0_i32 = arith.constant 0 : i32
    %c0_i32_0 = arith.constant 0 : i32
    return %arg0, %c0_i32, %arg1 : i32, i32, i32
  }
  func.func @transform_2(%arg0: i32, %arg1: i32) -> (i32, i32) {
    %c0_i32 = arith.constant 0 : i32
    %c0_i32_0 = arith.constant 0 : i32
    %c0_i32_1 = arith.constant 0 : i32
    return %c0_i32, %c0_i32_0 : i32, i32
  }
  func.func @transform_3(%arg0: i32, %arg1: i32) -> (i32, i32, i32) {
    %c0_i32 = arith.constant 0 : i32
    %c0_i32_0 = arith.constant 0 : i32
    return %arg0, %c0_i32, %arg1 : i32, i32, i32
  }
}

</mosaic_0001>

<llo_original>
// kernel: _unet_up_forward.3
$region0: #{_unet_up_forward.3}
  #allocation0 [shape = 'u32[]', space=smem, size = 0x4, offset = 0x4, fixed_abs, tag = 'smem constant byte address 0x4 - core index']
  #allocation1 [shape = 'u32[144,128]{1,0:T(1,128)}', space=vmem, size = 0x12000, scoped, tag = 'internal scratch']
  %s0 = inlined_call_operand.hbm [shape: f32[2,8,256], index: 0, kind: input, shape index: {}]
  %s1 = inlined_call_operand.hbm [shape: f32[2,8,256], index: 1, kind: input, shape index: {}]
  %s2 = inlined_call_operand.hbm [shape: f32[8,2], index: 2, kind: input, shape index: {}]
  %s3 = inlined_call_operand.hbm [shape: f32[2,16,256], index: 3, kind: output, shape index: {}]
  %s4 = sld [smem:[#allocation0]]
  $region57: #{_unet_up_forward.3} parent=0
    _
  %s6 = ssub.s32 1, %s4
  %s7 = scalar_select 0, %s6, %s4
  $region1: #{_unet_up_forward.3} parent=0
    #allocation2 [shape = 'u8[16384]{0}', space=vmem, size = 0x4000, scoped, tag = 'input window, operand 0']
    #allocation3 [shape = 's32[2]{0}', space=sflag, size = 0x8, scoped, tag = 'scoped memory for _unet_up_forward.3']
    #allocation4 [shape = 's32[2]{0}', space=sflag, size = 0x8, scoped, tag = 'scoped memory for _unet_up_forward.3']
    #allocation5 [shape = 'u8[16384]{0}', space=vmem, size = 0x4000, scoped, tag = 'input window, operand 1']
    #allocation6 [shape = 's32[2]{0}', space=sflag, size = 0x8, scoped, tag = 'scoped memory for _unet_up_forward.3']
    #allocation7 [shape = 'u8[4096]{0}', space=vmem, size = 0x1000, scoped, tag = 'input window, operand 2, single buffered']
    #allocation8 [shape = 'u8[32768]{0}', space=vmem, size = 0x8000, scoped, tag = 'output window, operand 0']
    %8 = vsyncpa [#allocation3], 0
    %s9 = scalar_lea.sflag [#allocation3], 1
    %10 = vsyncpa %s9, 0
    %11 = vsyncpa [#allocation6], 0
    %s12 = scalar_lea.sflag [#allocation6], 1
    %13 = vsyncpa %s12, 0
    %14 = vsyncpa [#allocation4], 0
    %s15 = scalar_lea.sflag [#allocation4], 1
    %16 = vsyncpa %s15, 0
    loop: start=0, step=1, limit=4
    $region2: #{_unet_up_forward.3} parent=1 // loop_pre_header
      _
    $region3: #{_unet_up_forward.3} parent=1 // loop_header
      %s18 = sphi 0, %s22
      %p19 = scmp.ge.s32.totalorder %s18, 4
      %s25 = sphi 0, %s37
      %s26 = sphi 0, %s33
      %s27 = sphi 0, %s25
      %s28 = sphi 0, %s26
      %s29 = sphi 0, %s27
      %s30 = sphi 0, %s28
      %s42 = sphi 0, %s44
      %s45 = sphi 0, %s42
      %s46 = sphi 0, %s45
      %s62 = sphi 0, %s46
      %s70 = sphi 0, %s72
      %s73 = sphi 0, %s70
      %s74 = sphi 0, %s73
      %s90 = sphi 0, %s74
      %s94 = sphi 0, %s94
      %s96 = sphi 0, %s94
      %s97 = sphi 0, %s96
      %s111 = sphi 0, %s97
      %s119 = sphi 0, %s121
      %s122 = sphi 0, %s119
      %s123 = sphi 0, %s122
      %s139 = sphi 0, %s123
    $region4: #{_unet_up_forward.3} parent=1 // loop_header_branch
      %21 = sbr.rel (%p19) target = $region8
    $region5: #{_unet_up_forward.3} parent=1 // loop_body
      %s23 = ssub.s32 %s18, 1
      %s24 = ssub.s32 %s18, 2
      %s31 = sadd.s32 1, %s26
      %p32 = scmp.ge.s32.totalorder %s31, 1
      %s33 = scalar_select %p32, 0, %s31
      %s34 = sadd.s32 1, %s25
      %s35 = scalar_select %p32, %s34, %s25
      %p36 = scmp.ge.s32.totalorder %s35, 2
      %s37 = scalar_select %p36, 0, %s35
      %s38 = ssub.s32 %s25, %s37
      %s39 = ssub.s32 %s26, %s33
      %s40 = sor.u32 %s38, %s39
      %p41 = scmp.eq.s32.totalorder %s40, 0
      %s43 = sadd.s32 %s42, 1
      %s44 = scalar_select %p41, %s42, %s43
      %p47 = pneg %p41
      %p48 = scmp.eq.s32.totalorder %s18, 1
      %p49 = por %p47, %p48
      %p50 = scmp.ne.s32.totalorder %s42, %s45
      %p51 = scmp.eq.s32.totalorder %s18, 0
      %p52 = por %p50, %p51
      %p53 = scmp.ne.s32.totalorder %s42, %s45
      %p54 = scmp.eq.s32.totalorder %s23, 1
      %p55 = por %p53, %p54
      %p56 = scmp.ne.s32.totalorder %s45, %s46
      %p57 = scmp.eq.s32.totalorder %s23, 0
      %p58 = por %p56, %p57
      %p59 = scmp.ne.s32.totalorder %s45, %s46
      %p60 = scmp.eq.s32.totalorder %s24, 1
      %p61 = por %p59, %p60
      %p63 = scmp.ne.s32.totalorder %s46, %s62
      %p64 = scmp.eq.s32.totalorder %s24, 0
      %p65 = por %p63, %p64
      %s66 = ssub.s32 %s25, %s37
      %s67 = ssub.s32 %s26, %s33
      %s68 = sor.u32 %s66, %s67
      %p69 = scmp.eq.s32.totalorder %s68, 0
      %s71 = sadd.s32 %s70, 1
      %s72 = scalar_select %p69, %s70, %s71
      %p75 = pneg %p69
      %p76 = scmp.eq.s32.totalorder %s18, 1
      %p77 = por %p75, %p76
      %p78 = scmp.ne.s32.totalorder %s70, %s73
      %p79 = scmp.eq.s32.totalorder %s18, 0
      %p80 = por %p78, %p79
      %p81 = scmp.ne.s32.totalorder %s70, %s73
      %p82 = scmp.eq.s32.totalorder %s23, 1
      %p83 = por %p81, %p82
      %p84 = scmp.ne.s32.totalorder %s73, %s74
      %p85 = scmp.eq.s32.totalorder %s23, 0
      %p86 = por %p84, %p85
      %p87 = scmp.ne.s32.totalorder %s73, %s74
      %p88 = scmp.eq.s32.totalorder %s24, 1
      %p89 = por %p87, %p88
      %p91 = scmp.ne.s32.totalorder %s74, %s90
      %p92 = scmp.eq.s32.totalorder %s24, 0
      %p93 = por %p91, %p92
      %s95 = sadd.s32 %s94, 1
      %p98 = scmp.eq.s32.totalorder %s18, 1
      %p99 = scmp.ne.s32.totalorder %s94, %s96
      %p100 = scmp.eq.s32.totalorder %s18, 0
      %p101 = por %p99, %p100
      %p102 = scmp.ne.s32.totalorder %s94, %s96
      %p103 = scmp.eq.s32.totalorder %s23, 1
      %p104 = por %p102, %p103
      %p105 = scmp.ne.s32.totalorder %s96, %s97
      %p106 = scmp.eq.s32.totalorder %s23, 0
      %p107 = por %p105, %p106
      %p108 = scmp.ne.s32.totalorder %s96, %s97
      %p109 = scmp.eq.s32.totalorder %s24, 1
      %p110 = por %p108, %p109
      %p112 = scmp.ne.s32.totalorder %s97, %s111
      %p113 = scmp.eq.s32.totalorder %s24, 0
      %p114 = por %p112, %p113
      %s115 = ssub.s32 %s25, %s37
      %s116 = ssub.s32 %s26, %s33
      %s117 = sor.u32 %s115, %s116
      %p118 = scmp.eq.s32.totalorder %s117, 0
      %s120 = sadd.s32 %s119, 1
      %s121 = scalar_select %p118, %s119, %s120
      %p124 = pneg %p118
      %p125 = scmp.eq.s32.totalorder %s18, 1
      %p126 = por %p124, %p125
      %p127 = scmp.ne.s32.totalorder %s119, %s122
      %p128 = scmp.eq.s32.totalorder %s18, 0
      %p129 = por %p127, %p128
      %p130 = scmp.ne.s32.totalorder %s119, %s122
      %p131 = scmp.eq.s32.totalorder %s23, 1
      %p132 = por %p130, %p131
      %p133 = scmp.ne.s32.totalorder %s122, %s123
      %p134 = scmp.eq.s32.totalorder %s23, 0
      %p135 = por %p133, %p134
      %p136 = scmp.ne.s32.totalorder %s122, %s123
      %p137 = scmp.eq.s32.totalorder %s24, 1
      %p138 = por %p136, %p137
      %p140 = scmp.ne.s32.totalorder %s123, %s139
      %p141 = scmp.eq.s32.totalorder %s24, 0
      %p142 = por %p140, %p141
      %p143 = scmp.le.s32.totalorder 1, %s18
      %p144 = scmp.lt.s32.totalorder %s18, 3
      %p145 = pnand %p143, %p144
      %p146 = pneg %p145
      // Predicated region
      $region9: #{_unet_up_forward.3} parent=5 // pred_check
        _
      $region10: #{_unet_up_forward.3} parent=5 // pred_check_branch
        %148 = sbr.rel (%p145) target = $region12
      $region11: #{_unet_up_forward.3} parent=5 // pred_region
        %s149 = ssub.s32 %s18, 1
        // Predicated region
        $region13: #{_unet_up_forward.3} parent=11 // pred_check
          %p150 = pneg %p107
        $region14: #{_unet_up_forward.3} parent=11 // pred_check_branch
          %152 = sbr.rel (%p150) target = $region16
        $region15: #{_unet_up_forward.3} parent=11 // pred_region
          %s154 = ssub.s32 128, 128
          %155 = vsyncadd [#allocation6], %s154
          %s157 = sshll.u32 [#allocation7], 4
          %s158 = int_to_ptr.vmem [resolvable:$true] %s157
          %160 = dma.hbm_to_vmem [thread:$0]  %s2, 128, %s158, [#allocation6]
        $region16: #{_unet_up_forward.3} parent=11 // pred_fallthru
          _
      $region12: #{_unet_up_forward.3} parent=5 // pred_fallthru
        _
      %p161 = scmp.lt.s32.totalorder %s18, 2
      // Predicated region
      $region17: #{_unet_up_forward.3} parent=5 // pred_check
        %p162 = pneg %p161
      $region18: #{_unet_up_forward.3} parent=5 // pred_check_branch
        %164 = sbr.rel (%p162) target = $region20
      $region19: #{_unet_up_forward.3} parent=5 // pred_region
        // Predicated region
        $region21: #{_unet_up_forward.3} parent=19 // pred_check
          %p165 = pneg %p52
        $region22: #{_unet_up_forward.3} parent=19 // pred_check_branch
          %167 = sbr.rel (%p165) target = $region24
        $region23: #{_unet_up_forward.3} parent=19 // pred_region
          %s168 = sand.u32 %s42, 1
          %s169 = scalar_lea.sflag [#allocation3], %s168
          %s170 = sand.u32 %s42, 1
          %s171 = smul.addr %s170, 16
          %s172 = scalar_lea.vmem [#allocation2], %s171
          %s173 = smul.u32 2, %s26
          %s175 = ssub.s32 256, 256
          %176 = vsyncadd %s169, %s175
          %s177 = smul.addr %s25, 2
          %s178 = sadd.s32 %s173, %s177
          %s179 = smul.addr %s178, 128
          %s180 = scalar_lea.hbm %s0, %s179
          %s182 = sshll.u32 %s172, 4
          %s183 = int_to_ptr.vmem [resolvable:$true] %s182
          %185 = dma.hbm_to_vmem [thread:$0]  %s180, 256, %s183, %s169
        $region24: #{_unet_up_forward.3} parent=19 // pred_fallthru
          _
        // Predicated region
        $region25: #{_unet_up_forward.3} parent=19 // pred_check
          %p186 = pneg %p80
        $region26: #{_unet_up_forward.3} parent=19 // pred_check_branch
          %188 = sbr.rel (%p186) target = $region28
        $region27: #{_unet_up_forward.3} parent=19 // pred_region
          %s189 = sand.u32 %s18, 1
          %s190 = scalar_lea.sflag [#allocation6], %s189
          %s191 = sand.u32 %s70, 1
          %s192 = smul.addr %s191, 16
          %s193 = scalar_lea.vmem [#allocation5], %s192
          %s194 = smul.u32 2, %s26
          %s196 = ssub.s32 256, 256
          %197 = vsyncadd %s190, %s196
          %s198 = smul.addr %s25, 2
          %s199 = sadd.s32 %s194, %s198
          %s200 = smul.addr %s199, 128
          %s201 = scalar_lea.hbm %s1, %s200
          %s203 = sshll.u32 %s193, 4
          %s204 = int_to_ptr.vmem [resolvable:$true] %s203
          %206 = dma.hbm_to_vmem [thread:$0]  %s201, 256, %s204, %s190
        $region28: #{_unet_up_forward.3} parent=19 // pred_fallthru
          _
      $region20: #{_unet_up_forward.3} parent=5 // pred_fallthru
        _
      %p207 = scmp.le.s32.totalorder 1, %s18
      %p208 = scmp.lt.s32.totalorder %s18, 3
      %p209 = pnand %p207, %p208
      %p210 = pneg %p209
      // Predicated region
      $region29: #{_unet_up_forward.3} parent=5 // pred_check
        _
      $region30: #{_unet_up_forward.3} parent=5 // pred_check_branch
        %212 = sbr.rel (%p209) target = $region32
      $region31: #{_unet_up_forward.3} parent=5 // pred_region
        %s213 = ssub.s32 %s18, 1
        %s214 = sand.u32 %s45, 1
        %s215 = scalar_lea.sflag [#allocation3], %s214
        %s216 = sand.u32 %s45, 1
        %s217 = smul.addr %s216, 16
        %s218 = scalar_lea.vmem [#allocation2], %s217
        // Predicated region
        $region33: #{_unet_up_forward.3} parent=31 // pred_check
          %p219 = pneg %p58
        $region34: #{_unet_up_forward.3} parent=31 // pred_check_branch
          %221 = sbr.rel (%p219) target = $region36
        $region35: #{_unet_up_forward.3} parent=31 // pred_region
          %222 = dma.done %s215, 256
        $region36: #{_unet_up_forward.3} parent=31 // pred_fallthru
          _
        %s223 = sand.u32 %s23, 1
        %s224 = scalar_lea.sflag [#allocation6], %s223
        %s225 = sand.u32 %s73, 1
        %s226 = smul.addr %s225, 16
        %s227 = scalar_lea.vmem [#allocation5], %s226
        // Predicated region
        $region37: #{_unet_up_forward.3} parent=31 // pred_check
          %p228 = pneg %p86
        $region38: #{_unet_up_forward.3} parent=31 // pred_check_branch
          %230 = sbr.rel (%p228) target = $region40
        $region39: #{_unet_up_forward.3} parent=31 // pred_region
          %231 = dma.done %s224, 256
        $region40: #{_unet_up_forward.3} parent=31 // pred_fallthru
          _
        // Predicated region
        $region41: #{_unet_up_forward.3} parent=31 // pred_check
          %p232 = pneg %p107
        $region42: #{_unet_up_forward.3} parent=31 // pred_check_branch
          %234 = sbr.rel (%p232) target = $region44
        $region43: #{_unet_up_forward.3} parent=31 // pred_region
          %235 = dma.done [#allocation6], 128
        $region44: #{_unet_up_forward.3} parent=31 // pred_fallthru
          _
        %s236 = sand.u32 %s45, 1
        %s237 = scalar_lea.sflag [#allocation3], %s236
        %s238 = sand.u32 %s45, 1
        %s239 = smul.addr %s238, 16
        %s240 = scalar_lea.vmem [#allocation2], %s239
        %p241 = pneg %p58
        %p242 = pneg %p55
        %s243 = sand.u32 %s23, 1
        %s244 = scalar_lea.sflag [#allocation6], %s243
        %s245 = sand.u32 %s73, 1
        %s246 = smul.addr %s245, 16
        %s247 = scalar_lea.vmem [#allocation5], %s246
        %p248 = pneg %p86
        %p249 = pneg %p83
        %p250 = pneg %p107
        %p251 = pneg %p104
        %p252 = pneg %p135
        %p253 = pneg %p132
        %s254 = sand.u32 %s122, 1
        %s255 = scalar_lea.sflag [#allocation4], %s254
        %s256 = sand.u32 %s122, 1
        %s257 = smul.addr %s256, 32
        %s258 = scalar_lea.vmem [#allocation8], %s257
        %s259 = smul.u32 2, %s28
        %s260 = smul.u32 2, %s28
        %s261 = smul.u32 2, %s28
        %v262 = vld [vmem:[#allocation7] sm:$0xff]
        %v263 = vld [vmem:[%s218] sm:$0xff]
        %v264 = vld [vmem:[%s218 + $0x8] sm:$0xff]
        %266 = vset.pattern.permute.xlu0 0
        %267 = vperm.xlu0 %266, %v262
        %v268 = vpop.permute.xlu0 %267
        %v270 = vmul.f32 %v263, %v268
        %v271 = vmul.f32 %v264, %v268
        %272 = vset.pattern.permute.xlu0 1
        %273 = vperm.xlu0 %272, %v262
        %v274 = vpop.permute.xlu0 %273
        %v276 = vadd.f32 %v270, %v274
        %v277 = vadd.f32 %v271, %v274
        %v278 = vmax.f32 %v276, 0.0
        %v279 = vmax.f32 %v277, 0.0
        %280 = vst [vmem:[%s258] sm:$0xff] %v278
        %281 = vst [vmem:[%s258 + $0x8] sm:$0xff] %v279
        %v282 = vld [vmem:[%s227] sm:$0xff]
        %v283 = vld [vmem:[%s227 + $0x8] sm:$0xff]
        %284 = vst [vmem:[%s258 + $0x10] sm:$0xff] %v282
        %285 = vst [vmem:[%s258 + $0x18] sm:$0xff] %v283
        %s286 = sand.u32 %s122, 1
        %s287 = scalar_lea.sflag [#allocation4], %s286
        %s288 = sand.u32 %s122, 1
        %s289 = smul.addr %s288, 32
        %s290 = scalar_lea.vmem [#allocation8], %s289
        // Predicated region
        $region45: #{_unet_up_forward.3} parent=31 // pred_check
          %p291 = pneg %p132
        $region46: #{_unet_up_forward.3} parent=31 // pred_check_branch
          %293 = sbr.rel (%p291) target = $region48
        $region47: #{_unet_up_forward.3} parent=31 // pred_region
          %s294 = smul.u32 2, %s28
          %s296 = ssub.s32 512, 512
          %297 = vsyncadd %s287, %s296
          %s298 = smul.addr %s27, 4
          %s299 = sadd.s32 %s294, %s298
          %s300 = smul.addr %s299, 128
          %s301 = scalar_lea.hbm %s3, %s300
          %s302 = sshll.u32 %s290, 4
          %s303 = int_to_ptr.vmem [resolvable:$true] %s302
          %308 = dma.vmem_to_hbm [thread:$0]  %s303, 512, %s301, %s287, 256, 256, 16
        $region48: #{_unet_up_forward.3} parent=31 // pred_fallthru
          _
      $region32: #{_unet_up_forward.3} parent=5 // pred_fallthru
        _
      %p309 = scmp.le.s32.totalorder 2, %s18
      // Predicated region
      $region49: #{_unet_up_forward.3} parent=5 // pred_check
        %p310 = pneg %p309
      $region50: #{_unet_up_forward.3} parent=5 // pred_check_branch
        %312 = sbr.rel (%p310) target = $region52
      $region51: #{_unet_up_forward.3} parent=5 // pred_region
        %s313 = ssub.s32 %s18, 2
        // Predicated region
        $region53: #{_unet_up_forward.3} parent=51 // pred_check
          %p314 = pneg %p138
        $region54: #{_unet_up_forward.3} parent=51 // pred_check_branch
          %316 = sbr.rel (%p314) target = $region56
        $region55: #{_unet_up_forward.3} parent=51 // pred_region
          %s317 = sand.u32 %s123, 1
          %s318 = scalar_lea.sflag [#allocation4], %s317
          %s319 = sand.u32 %s123, 1
          %s320 = smul.addr %s319, 32
          %s321 = scalar_lea.vmem [#allocation8], %s320
          %322 = dma.done %s318, 512
        $region56: #{_unet_up_forward.3} parent=51 // pred_fallthru
          _
      $region52: #{_unet_up_forward.3} parent=5 // pred_fallthru
        _
    $region6: #{_unet_up_forward.3} parent=1 // loop_footer
      %s22 = sadd.s32 1, %s18
    $region7: #{_unet_up_forward.3} parent=1 // loop_footer_branch
      %17 = sbr.rel target = $region3
    $region8: #{_unet_up_forward.3} parent=1 // loop_exit
      _
    %323 = vsyncpa [#allocation3], 1
    %s324 = scalar_lea.sflag [#allocation3], 1
    %325 = vsyncpa %s324, 1
    %326 = vsyncpa [#allocation6], 1
    %s327 = scalar_lea.sflag [#allocation6], 1
    %328 = vsyncpa %s327, 1
    %329 = vsyncpa [#allocation4], 1
    %s330 = scalar_lea.sflag [#allocation4], 1
    %331 = vsyncpa %s330, 1

// kernel: _unet_up_forward.2
$region0: #{_unet_up_forward.2}
  #allocation0 [shape = 'u32[]', space=smem, size = 0x4, offset = 0x4, fixed_abs, tag = 'smem constant byte address 0x4 - core index']
  #allocation1 [shape = 'u32[144,128]{1,0:T(1,128)}', space=vmem, size = 0x12000, scoped, tag = 'internal scratch']
  #allocation2 [shape = 'f32[72,256]{1,0:T(8,128)}', space=vmem, size = 0x12000, scoped, tag = 'scratch operand']
  %s0 = inlined_call_operand.hbm [shape: f32[2,1,8,290], index: 0, kind: input, shape index: {}]
  %s1 = inlined_call_operand.hbm [shape: f32[8,72], index: 1, kind: input, shape index: {}]
  %s2 = inlined_call_operand.hbm [shape: f32[2,256], index: 2, kind: input, shape index: {}]
  %s3 = inlined_call_operand.hbm [shape: f32[2,8,256], index: 3, kind: output, shape index: {0}]
  %s4 = inlined_call_operand.hbm [shape: f32[2,1,8,2], index: 4, kind: output, shape index: {1}]
  %5 = xla_tuple %s3, %s4
  %s6 = sld [smem:[#allocation0]]
  $region65: #{_unet_up_forward.2} parent=0
    _
  %s8 = ssub.s32 1, %s6
  %s9 = scalar_select 0, %s8, %s6
  $region1: #{_unet_up_forward.2} parent=0
    #allocation3 [shape = 'u8[24576]{0}', space=vmem, size = 0x6000, scoped, tag = 'input window, operand 0']
    #allocation4 [shape = 's32[2]{0}', space=sflag, size = 0x8, scoped, tag = 'scoped memory for _unet_up_forward.2']
    #allocation5 [shape = 's32[2]{0}', space=sflag, size = 0x8, scoped, tag = 'scoped memory for _unet_up_forward.2']
    #allocation6 [shape = 'u8[4096]{0}', space=vmem, size = 0x1000, scoped, tag = 'input window, operand 1, single buffered']
    #allocation7 [shape = 's32[1]{0}', space=sflag, size = 0x4, scoped, tag = 'scoped memory for _unet_up_forward.2']
    #allocation8 [shape = 'u8[2048]{0}', space=vmem, size = 0x800, scoped, tag = 'input window, operand 2, single buffered']
    #allocation9 [shape = 'u8[16384]{0}', space=vmem, size = 0x4000, scoped, tag = 'output window, operand 0']
    #allocation10 [shape = 'u8[8192]{0}', space=vmem, size = 0x2000, scoped, tag = 'output window, operand 1']
    #allocation11 [shape = 's32[2]{0}', space=sflag, size = 0x8, scoped, tag = 'scoped memory for _unet_up_forward.2']
    %10 = vsyncpa [#allocation4], 0
    %s11 = scalar_lea.sflag [#allocation4], 1
    %12 = vsyncpa %s11, 0
    %13 = vsyncpa [#allocation7], 0
    %14 = vsyncpa [#allocation5], 0
    %s15 = scalar_lea.sflag [#allocation5], 1
    %16 = vsyncpa %s15, 0
    %17 = vsyncpa [#allocation11], 0
    %s18 = scalar_lea.sflag [#allocation11], 1
    %19 = vsyncpa %s18, 0
    loop: start=0, step=1, limit=4
    $region2: #{_unet_up_forward.2} parent=1 // loop_pre_header
      _
    $region3: #{_unet_up_forward.2} parent=1 // loop_header
      %s21 = sphi 0, %s25
      %p22 = scmp.ge.s32.totalorder %s21, 4
      %s28 = sphi 0, %s40
      %s29 = sphi 0, %s36
      %s30 = sphi 0, %s28
      %s31 = sphi 0, %s29
      %s32 = sphi 0, %s30
      %s33 = sphi 0, %s31
      %s45 = sphi 0, %s47
      %s48 = sphi 0, %s45
      %s49 = sphi 0, %s48
      %s65 = sphi 0, %s49
      %s69 = sphi 0, %s69
      %s71 = sphi 0, %s69
      %s72 = sphi 0, %s71
      %s86 = sphi 0, %s72
      %s90 = sphi 0, %s90
      %s92 = sphi 0, %s90
      %s93 = sphi 0, %s92
      %s107 = sphi 0, %s93
      %s115 = sphi 0, %s117
      %s118 = sphi 0, %s115
      %s119 = sphi 0, %s118
      %s135 = sphi 0, %s119
      %s143 = sphi 0, %s145
      %s146 = sphi 0, %s143
      %s147 = sphi 0, %s146
      %s163 = sphi 0, %s147
    $region4: #{_unet_up_forward.2} parent=1 // loop_header_branch
      %24 = sbr.rel (%p22) target = $region8
    $region5: #{_unet_up_forward.2} parent=1 // loop_body
      %s26 = ssub.s32 %s21, 1
      %s27 = ssub.s32 %s21, 2
      %s34 = sadd.s32 1, %s29
      %p35 = scmp.ge.s32.totalorder %s34, 1
      %s36 = scalar_select %p35, 0, %s34
      %s37 = sadd.s32 1, %s28
      %s38 = scalar_select %p35, %s37, %s28
      %p39 = scmp.ge.s32.totalorder %s38, 2
      %s40 = scalar_select %p39, 0, %s38
      %s41 = ssub.s32 %s28, %s40
      %s42 = ssub.s32 %s29, %s36
      %s43 = sor.u32 %s41, %s42
      %p44 = scmp.eq.s32.totalorder %s43, 0
      %s46 = sadd.s32 %s45, 1
      %s47 = scalar_select %p44, %s45, %s46
      %p50 = pneg %p44
      %p51 = scmp.eq.s32.totalorder %s21, 1
      %p52 = por %p50, %p51
      %p53 = scmp.ne.s32.totalorder %s45, %s48
      %p54 = scmp.eq.s32.totalorder %s21, 0
      %p55 = por %p53, %p54
      %p56 = scmp.ne.s32.totalorder %s45, %s48
      %p57 = scmp.eq.s32.totalorder %s26, 1
      %p58 = por %p56, %p57
      %p59 = scmp.ne.s32.totalorder %s48, %s49
      %p60 = scmp.eq.s32.totalorder %s26, 0
      %p61 = por %p59, %p60
      %p62 = scmp.ne.s32.totalorder %s48, %s49
      %p63 = scmp.eq.s32.totalorder %s27, 1
      %p64 = por %p62, %p63
      %p66 = scmp.ne.s32.totalorder %s49, %s65
      %p67 = scmp.eq.s32.totalorder %s27, 0
      %p68 = por %p66, %p67
      %s70 = sadd.s32 %s69, 1
      %p73 = scmp.eq.s32.totalorder %s21, 1
      %p74 = scmp.ne.s32.totalorder %s69, %s71
      %p75 = scmp.eq.s32.totalorder %s21, 0
      %p76 = por %p74, %p75
      %p77 = scmp.ne.s32.totalorder %s69, %s71
      %p78 = scmp.eq.s32.totalorder %s26, 1
      %p79 = por %p77, %p78
      %p80 = scmp.ne.s32.totalorder %s71, %s72
      %p81 = scmp.eq.s32.totalorder %s26, 0
      %p82 = por %p80, %p81
      %p83 = scmp.ne.s32.totalorder %s71, %s72
      %p84 = scmp.eq.s32.totalorder %s27, 1
      %p85 = por %p83, %p84
      %p87 = scmp.ne.s32.totalorder %s72, %s86
      %p88 = scmp.eq.s32.totalorder %s27, 0
      %p89 = por %p87, %p88
      %s91 = sadd.s32 %s90, 1
      %p94 = scmp.eq.s32.totalorder %s21, 1
      %p95 = scmp.ne.s32.totalorder %s90, %s92
      %p96 = scmp.eq.s32.totalorder %s21, 0
      %p97 = por %p95, %p96
      %p98 = scmp.ne.s32.totalorder %s90, %s92
      %p99 = scmp.eq.s32.totalorder %s26, 1
      %p100 = por %p98, %p99
      %p101 = scmp.ne.s32.totalorder %s92, %s93
      %p102 = scmp.eq.s32.totalorder %s26, 0
      %p103 = por %p101, %p102
      %p104 = scmp.ne.s32.totalorder %s92, %s93
      %p105 = scmp.eq.s32.totalorder %s27, 1
      %p106 = por %p104, %p105
      %p108 = scmp.ne.s32.totalorder %s93, %s107
      %p109 = scmp.eq.s32.totalorder %s27, 0
      %p110 = por %p108, %p109
      %s111 = ssub.s32 %s28, %s40
      %s112 = ssub.s32 %s29, %s36
      %s113 = sor.u32 %s111, %s112
      %p114 = scmp.eq.s32.totalorder %s113, 0
      %s116 = sadd.s32 %s115, 1
      %s117 = scalar_select %p114, %s115, %s116
      %p120 = pneg %p114
      %p121 = scmp.eq.s32.totalorder %s21, 1
      %p122 = por %p120, %p121
      %p123 = scmp.ne.s32.totalorder %s115, %s118
      %p124 = scmp.eq.s32.totalorder %s21, 0
      %p125 = por %p123, %p124
      %p126 = scmp.ne.s32.totalorder %s115, %s118
      %p127 = scmp.eq.s32.totalorder %s26, 1
      %p128 = por %p126, %p127
      %p129 = scmp.ne.s32.totalorder %s118, %s119
      %p130 = scmp.eq.s32.totalorder %s26, 0
      %p131 = por %p129, %p130
      %p132 = scmp.ne.s32.totalorder %s118, %s119
      %p133 = scmp.eq.s32.totalorder %s27, 1
      %p134 = por %p132, %p133
      %p136 = scmp.ne.s32.totalorder %s119, %s135
      %p137 = scmp.eq.s32.totalorder %s27, 0
      %p138 = por %p136, %p137
      %s139 = ssub.s32 %s28, %s40
      %s140 = ssub.s32 %s29, %s36
      %s141 = sor.u32 %s139, %s140
      %p142 = scmp.eq.s32.totalorder %s141, 0
      %s144 = sadd.s32 %s143, 1
      %s145 = scalar_select %p142, %s143, %s144
      %p148 = pneg %p142
      %p149 = scmp.eq.s32.totalorder %s21, 1
      %p150 = por %p148, %p149
      %p151 = scmp.ne.s32.totalorder %s143, %s146
      %p152 = scmp.eq.s32.totalorder %s21, 0
      %p153 = por %p151, %p152
      %p154 = scmp.ne.s32.totalorder %s143, %s146
      %p155 = scmp.eq.s32.totalorder %s26, 1
      %p156 = por %p154, %p155
      %p157 = scmp.ne.s32.totalorder %s146, %s147
      %p158 = scmp.eq.s32.totalorder %s26, 0
      %p159 = por %p157, %p158
      %p160 = scmp.ne.s32.totalorder %s146, %s147
      %p161 = scmp.eq.s32.totalorder %s27, 1
      %p162 = por %p160, %p161
      %p164 = scmp.ne.s32.totalorder %s147, %s163
      %p165 = scmp.eq.s32.totalorder %s27, 0
      %p166 = por %p164, %p165
      %p167 = scmp.le.s32.totalorder 1, %s21
      %p168 = scmp.lt.s32.totalorder %s21, 3
      %p169 = pnand %p167, %p168
      %p170 = pneg %p169
      // Predicated region
      $region9: #{_unet_up_forward.2} parent=5 // pred_check
        _
      $region10: #{_unet_up_forward.2} parent=5 // pred_check_branch
        %172 = sbr.rel (%p169) target = $region12
      $region11: #{_unet_up_forward.2} parent=5 // pred_region
        %s173 = ssub.s32 %s21, 1
        // Predicated region
        $region13: #{_unet_up_forward.2} parent=11 // pred_check
          %p174 = pneg %p82
        $region14: #{_unet_up_forward.2} parent=11 // pred_check_branch
          %176 = sbr.rel (%p174) target = $region16
        $region15: #{_unet_up_forward.2} parent=11 // pred_region
          %s178 = ssub.s32 128, 128
          %179 = vsyncadd [#allocation7], %s178
          %s181 = sshll.u32 [#allocation6], 4
          %s182 = int_to_ptr.vmem [resolvable:$true] %s181
          %184 = dma.hbm_to_vmem [thread:$0]  %s1, 128, %s182, [#allocation7]
        $region16: #{_unet_up_forward.2} parent=11 // pred_fallthru
          _
        // Predicated region
        $region17: #{_unet_up_forward.2} parent=11 // pred_check
          %p185 = pneg %p103
        $region18: #{_unet_up_forward.2} parent=11 // pred_check_branch
          %187 = sbr.rel (%p185) target = $region20
        $region19: #{_unet_up_forward.2} parent=11 // pred_region
          %s189 = ssub.s32 64, 64
          %190 = vsyncadd [#allocation7], %s189
          %s192 = sshll.u32 [#allocation8], 4
          %s193 = int_to_ptr.vmem [resolvable:$true] %s192
          %195 = dma.hbm_to_vmem [thread:$0]  %s2, 64, %s193, [#allocation7]
        $region20: #{_unet_up_forward.2} parent=11 // pred_fallthru
          _
      $region12: #{_unet_up_forward.2} parent=5 // pred_fallthru
        _
      %p196 = scmp.lt.s32.totalorder %s21, 2
      // Predicated region
      $region21: #{_unet_up_forward.2} parent=5 // pred_check
        %p197 = pneg %p196
      $region22: #{_unet_up_forward.2} parent=5 // pred_check_branch
        %199 = sbr.rel (%p197) target = $region24
      $region23: #{_unet_up_forward.2} parent=5 // pred_region
        // Predicated region
        $region25: #{_unet_up_forward.2} parent=23 // pred_check
          %p200 = pneg %p55
        $region26: #{_unet_up_forward.2} parent=23 // pred_check_branch
          %202 = sbr.rel (%p200) target = $region28
        $region27: #{_unet_up_forward.2} parent=23 // pred_region
          %s203 = sand.u32 %s45, 1
          %s204 = scalar_lea.sflag [#allocation4], %s203
          %s205 = sand.u32 %s45, 1
          %s206 = smul.addr %s205, 24
          %s207 = scalar_lea.vmem [#allocation3], %s206
          %s209 = ssub.s32 384, 384
          %210 = vsyncadd %s204, %s209
          %s211 = smul.addr %s29, 3
          %s212 = smul.addr %s28, 3
          %s213 = sadd.s32 %s211, %s212
          %s214 = smul.addr %s213, 128
          %s215 = scalar_lea.hbm %s0, %s214
          %s217 = sshll.u32 %s207, 4
          %s218 = int_to_ptr.vmem [resolvable:$true] %s217
          %220 = dma.hbm_to_vmem [thread:$0]  %s215, 384, %s218, %s204
        $region28: #{_unet_up_forward.2} parent=23 // pred_fallthru
          _
      $region24: #{_unet_up_forward.2} parent=5 // pred_fallthru
        _
      %p221 = scmp.le.s32.totalorder 1, %s21
      %p222 = scmp.lt.s32.totalorder %s21, 3
      %p223 = pnand %p221, %p222
      %p224 = pneg %p223
      // Predicated region
      $region29: #{_unet_up_forward.2} parent=5 // pred_check
        _
      $region30: #{_unet_up_forward.2} parent=5 // pred_check_branch
        %226 = sbr.rel (%p223) target = $region32
      $region31: #{_unet_up_forward.2} parent=5 // pred_region
        %s227 = ssub.s32 %s21, 1
        %s228 = sand.u32 %s48, 1
        %s229 = scalar_lea.sflag [#allocation4], %s228
        %s230 = sand.u32 %s48, 1
        %s231 = smul.addr %s230, 24
        %s232 = scalar_lea.vmem [#allocation3], %s231
        // Predicated region
        $region33: #{_unet_up_forward.2} parent=31 // pred_check
          %p233 = pneg %p61
        $region34: #{_unet_up_forward.2} parent=31 // pred_check_branch
          %235 = sbr.rel (%p233) target = $region36
        $region35: #{_unet_up_forward.2} parent=31 // pred_region
          %236 = dma.done %s229, 384
        $region36: #{_unet_up_forward.2} parent=31 // pred_fallthru
          _
        // Predicated region
        $region37: #{_unet_up_forward.2} parent=31 // pred_check
          %p237 = pneg %p82
        $region38: #{_unet_up_forward.2} parent=31 // pred_check_branch
          %239 = sbr.rel (%p237) target = $region40
        $region39: #{_unet_up_forward.2} parent=31 // pred_region
          %240 = dma.done [#allocation7], 128
        $region40: #{_unet_up_forward.2} parent=31 // pred_fallthru
          _
        // Predicated region
        $region41: #{_unet_up_forward.2} parent=31 // pred_check
          %p241 = pneg %p103
        $region42: #{_unet_up_forward.2} parent=31 // pred_check_branch
          %243 = sbr.rel (%p241) target = $region44
        $region43: #{_unet_up_forward.2} parent=31 // pred_region
          %244 = dma.done [#allocation7], 64
        $region44: #{_unet_up_forward.2} parent=31 // pred_fallthru
          _
        %s245 = sand.u32 %s48, 1
        %s246 = scalar_lea.sflag [#allocation4], %s245
        %s247 = sand.u32 %s48, 1
        %s248 = smul.addr %s247, 24
        %s249 = scalar_lea.vmem [#allocation3], %s248
        %p250 = pneg %p61
        %p251 = pneg %p58
        %p252 = pneg %p82
        %p253 = pneg %p79
        %p254 = pneg %p103
        %p255 = pneg %p100
        %p256 = pneg %p131
        %p257 = pneg %p128
        %s258 = sand.u32 %s118, 1
        %s259 = scalar_lea.sflag [#allocation5], %s258
        %s260 = sand.u32 %s118, 1
        %s261 = smul.addr %s260, 16
        %s262 = scalar_lea.vmem [#allocation9], %s261
        %p263 = pneg %p159
        %p264 = pneg %p156
        %s265 = sand.u32 %s146, 1
        %s266 = scalar_lea.sflag [#allocation11], %s265
        %s267 = sand.u32 %s146, 1
        %s268 = smul.addr %s267, 8
        %s269 = scalar_lea.vmem [#allocation10], %s268
        %s270 = smul.u32 2, %s31
        %v271 = vld [vmem:[#allocation8] ss:$2 sm:$0x3]
        %s272 = scalar_lea.vmem [#allocation8], 1
        %v273 = vld [vmem:[%s272] ss:$2 sm:$0x3]
        %v274 = vld [vmem:[%s232] sm:$0xff]
        %v275 = vld [vmem:[%s232 + $0x8] sm:$0xff]
        %v277 = vlaneseq
        %v278 = vshrl.u32 %v277, 7
        %v279 = vsub.s32 0, %v278
        %v280 = vrot.slane %v271, %v279
        %v281 = vlaneseq
        %v282 = vshrl.u32 %v281, 7
        %v283 = vsub.s32 1, %v282
        %v284 = vrot.slane %v271, %v283
        %v287 = vmul.f32 %v274, %v280
        %v288 = vmul.f32 %v275, %v284
        %289 = vst [vmem:[#allocation2] sm:$0xff] %v287
        %290 = vst [vmem:[#allocation2 + $0x8] sm:$0xff] %v288
        %v291 = vld [vmem:[%s232] sm:$0xff]
        %v292 = vld [vmem:[%s232 + $0x8] sm:$0xff]
        %v293 = vld [vmem:[%s232 + $0x10] sm:$0xff]
        %297 = vrot.lane.b32.xlu0 %v291, 127
        %v298 = vpop.permute.xlu0 %297
        %299 = vrot.lane.b32.xlu0 %v292, 127
        %v300 = vpop.permute.xlu0 %299
        %301 = vrot.lane.b32.xlu0 %v293, 127
        %v302 = vpop.permute.xlu0 %301
        %vm303 = vcmask 1039360
        %v304 = vsel %vm303, %v298, %v300
        %v305 = vsel %vm303, %v300, %v302
        %308 = vst [vmem:[#allocation2 + $0x10] sm:$0xff] %v304
        %309 = vst [vmem:[#allocation2 + $0x18] sm:$0xff] %v305
        %v310 = vld [vmem:[%s232] sm:$0xff]
        %v311 = vld [vmem:[%s232 + $0x8] sm:$0xff]
        %v312 = vld [vmem:[%s232 + $0x10] sm:$0xff]
        %v314 = vlaneseq
        %v315 = vshrl.u32 %v314, 7
        %v316 = vsub.s32 0, %v315
        %v317 = vrot.slane %v273, %v316
        %v318 = vlaneseq
        %v319 = vshrl.u32 %v318, 7
        %v320 = vsub.s32 1, %v319
        %v321 = vrot.slane %v273, %v320
        %322 = vrot.lane.b32.xlu0 %v317, 2
        %v323 = vpop.permute.xlu0 %322
        %324 = vrot.lane.b32.xlu0 %v321, 2
        %v325 = vpop.permute.xlu0 %324
        %vm326 = vcmask 15360
        %v327 = vsel %vm326, %v323, %v325
        %v331 = vmul.f32 %v310, %v323
        %v332 = vmul.f32 %v311, %v327
        %v333 = vmul.f32 %v312, %v325
        %337 = vrot.lane.b32.xlu0 %v331, 126
        %v338 = vpop.permute.xlu0 %337
        %339 = vrot.lane.b32.xlu0 %v332, 126
        %v340 = vpop.permute.xlu0 %339
        %341 = vrot.lane.b32.xlu0 %v333, 126
        %v342 = vpop.permute.xlu0 %341
        %vm343 = vcmask 1031168
        %v344 = vsel %vm343, %v338, %v340
        %v345 = vsel %vm343, %v340, %v342
        %348 = vst [vmem:[#allocation2 + $0x20] sm:$0xff] %v344
        %349 = vst [vmem:[#allocation2 + $0x28] sm:$0xff] %v345
        %v350 = vld [vmem:[%s232] sm:$0xff]
        %v351 = vld [vmem:[%s232 + $0x8] sm:$0xff]
        %v352 = vld [vmem:[%s232 + $0x10] sm:$0xff]
        %353 = vrot.lane.b32.xlu0 %v280, 16
        %v354 = vpop.permute.xlu0 %353
        %355 = vrot.lane.b32.xlu0 %v284, 16
        %v356 = vpop.permute.xlu0 %355
        %vm357 = vcmask 130048
        %v358 = vsel %vm357, %v354, %v356
        %v362 = vmul.f32 %v350, %v354
        %v363 = vmul.f32 %v351, %v358
        %v364 = vmul.f32 %v352, %v356
        %368 = vrot.lane.b32.xlu0 %v362, 112
        %v369 = vpop.permute.xlu0 %368
        %370 = vrot.lane.b32.xlu0 %v363, 112
        %v371 = vpop.permute.xlu0 %370
        %372 = vrot.lane.b32.xlu0 %v364, 112
        %v373 = vpop.permute.xlu0 %372
        %vm374 = vcmask 916480
        %v375 = vsel %vm374, %v369, %v371
        %v376 = vsel %vm374, %v371, %v373
        %379 = vst [vmem:[#allocation2 + $0x30] sm:$0xff] %v375
        %380 = vst [vmem:[#allocation2 + $0x38] sm:$0xff] %v376
        %v381 = vld [vmem:[%s232] sm:$0xff]
        %v382 = vld [vmem:[%s232 + $0x8] sm:$0xff]
        %v383 = vld [vmem:[%s232 + $0x10] sm:$0xff]
        %387 = vrot.lane.b32.xlu0 %v381, 111
        %v388 = vpop.permute.xlu0 %387
        %389 = vrot.lane.b32.xlu0 %v382, 111
        %v390 = vpop.permute.xlu0 %389
        %391 = vrot.lane.b32.xlu0 %v383, 111
        %v392 = vpop.permute.xlu0 %391
        %vm393 = vcmask 908288
        %v394 = vsel %vm393, %v388, %v390
        %v395 = vsel %vm393, %v390, %v392
        %398 = vst [vmem:[#allocation2 + $0x40] sm:$0xff] %v394
        %399 = vst [vmem:[#allocation2 + $0x48] sm:$0xff] %v395
        %v400 = vld [vmem:[%s232] sm:$0xff]
        %v401 = vld [vmem:[%s232 + $0x8] sm:$0xff]
        %v402 = vld [vmem:[%s232 + $0x10] sm:$0xff]
        %403 = vrot.lane.b32.xlu0 %v317, 18
        %v404 = vpop.permute.xlu0 %403
        %405 = vrot.lane.b32.xlu0 %v321, 18
        %v406 = vpop.permute.xlu0 %405
        %vm407 = vcmask 146432
        %v408 = vsel %vm407, %v404, %v406
        %v412 = vmul.f32 %v400, %v404
        %v413 = vmul.f32 %v401, %v408
        %v414 = vmul.f32 %v402, %v406
        %418 = vrot.lane.b32.xlu0 %v412, 110
        %v419 = vpop.permute.xlu0 %418
        %420 = vrot.lane.b32.xlu0 %v413, 110
        %v421 = vpop.permute.xlu0 %420
        %422 = vrot.lane.b32.xlu0 %v414, 110
        %v423 = vpop.permute.xlu0 %422
        %vm424 = vcmask 900096
        %v425 = vsel %vm424, %v419, %v421
        %v426 = vsel %vm424, %v421, %v423
        %429 = vst [vmem:[#allocation2 + $0x50] sm:$0xff] %v425
        %430 = vst [vmem:[#allocation2 + $0x58] sm:$0xff] %v426
        %v431 = vld [vmem:[%s232] sm:$0xff]
        %v432 = vld [vmem:[%s232 + $0x8] sm:$0xff]
        %v433 = vld [vmem:[%s232 + $0x10] sm:$0xff]
        %434 = vrot.lane.b32.xlu0 %v280, 32
        %v435 = vpop.permute.xlu0 %434
        %436 = vrot.lane.b32.xlu0 %v284, 32
        %v437 = vpop.permute.xlu0 %436
        %vm438 = vcmask 261120
        %v439 = vsel %vm438, %v435, %v437
        %v443 = vmul.f32 %v431, %v435
        %v444 = vmul.f32 %v432, %v439
        %v445 = vmul.f32 %v433, %v437
        %449 = vrot.lane.b32.xlu0 %v443, 96
        %v450 = vpop.permute.xlu0 %449
        %451 = vrot.lane.b32.xlu0 %v444, 96
        %v452 = vpop.permute.xlu0 %451
        %453 = vrot.lane.b32.xlu0 %v445, 96
        %v454 = vpop.permute.xlu0 %453
        %vm455 = vcmask 785408
        %v456 = vsel %vm455, %v450, %v452
        %v457 = vsel %vm455, %v452, %v454
        %460 = vst [vmem:[#allocation2 + $0x60] sm:$0xff] %v456
        %461 = vst [vmem:[#allocation2 + $0x68] sm:$0xff] %v457
        %v462 = vld [vmem:[%s232] sm:$0xff]
        %v463 = vld [vmem:[%s232 + $0x8] sm:$0xff]
        %v464 = vld [vmem:[%s232 + $0x10] sm:$0xff]
        %468 = vrot.lane.b32.xlu0 %v462, 95
        %v469 = vpop.permute.xlu0 %468
        %470 = vrot.lane.b32.xlu0 %v463, 95
        %v471 = vpop.permute.xlu0 %470
        %472 = vrot.lane.b32.xlu0 %v464, 95
        %v473 = vpop.permute.xlu0 %472
        %vm474 = vcmask 777216
        %v475 = vsel %vm474, %v469, %v471
        %v476 = vsel %vm474, %v471, %v473
        %479 = vst [vmem:[#allocation2 + $0x70] sm:$0xff] %v475
        %480 = vst [vmem:[#allocation2 + $0x78] sm:$0xff] %v476
        %v481 = vld [vmem:[%s232] sm:$0xff]
        %v482 = vld [vmem:[%s232 + $0x8] sm:$0xff]
        %v483 = vld [vmem:[%s232 + $0x10] sm:$0xff]
        %484 = vrot.lane.b32.xlu0 %v317, 34
        %v485 = vpop.permute.xlu0 %484
        %486 = vrot.lane.b32.xlu0 %v321, 34
        %v487 = vpop.permute.xlu0 %486
        %vm488 = vcmask 277504
        %v489 = vsel %vm488, %v485, %v487
        %v493 = vmul.f32 %v481, %v485
        %v494 = vmul.f32 %v482, %v489
        %v495 = vmul.f32 %v483, %v487
        %499 = vrot.lane.b32.xlu0 %v493, 94
        %v500 = vpop.permute.xlu0 %499
        %501 = vrot.lane.b32.xlu0 %v494, 94
        %v502 = vpop.permute.xlu0 %501
        %503 = vrot.lane.b32.xlu0 %v495, 94
        %v504 = vpop.permute.xlu0 %503
        %vm505 = vcmask 769024
        %v506 = vsel %vm505, %v500, %v502
        %v507 = vsel %vm505, %v502, %v504
        %510 = vst [vmem:[#allocation2 + $0x80] sm:$0xff] %v506
        %511 = vst [vmem:[#allocation2 + $0x88] sm:$0xff] %v507
        %v512 = vld [vmem:[#allocation6] sm:$0xff]
        %v513 = vld [vmem:[#allocation2] sm:$0xff]
        %v514 = vld [vmem:[#allocation2 + $0x8] sm:$0xff]
        %v515 = vld [vmem:[#allocation2 + $0x10] sm:$0xff]
        %v516 = vld [vmem:[#allocation2 + $0x18] sm:$0xff]
        %v517 = vld [vmem:[#allocation2 + $0x20] sm:$0xff]
        %v518 = vld [vmem:[#allocation2 + $0x28] sm:$0xff]
        %v519 = vld [vmem:[#allocation2 + $0x30] sm:$0xff]
        %v520 = vld [vmem:[#allocation2 + $0x38] sm:$0xff]
        %v521 = vld [vmem:[#allocation2 + $0x40] sm:$0xff]
        %v522 = vld [vmem:[#allocation2 + $0x48] sm:$0xff]
        %v523 = vld [vmem:[#allocation2 + $0x50] sm:$0xff]
        %v524 = vld [vmem:[#allocation2 + $0x58] sm:$0xff]
        %v525 = vld [vmem:[#allocation2 + $0x60] sm:$0xff]
        %v526 = vld [vmem:[#allocation2 + $0x68] sm:$0xff]
        %v527 = vld [vmem:[#allocation2 + $0x70] sm:$0xff]
        %v528 = vld [vmem:[#allocation2 + $0x78] sm:$0xff]
        %v529 = vld [vmem:[#allocation2 + $0x80] sm:$0xff]
        %v530 = vld [vmem:[#allocation2 + $0x88] sm:$0xff]
        %vm531 = vcmask 588800
        %v533 = vsel %vm531, %v512, 0
        %535 = vmatprep.subr.mxu0 %v514
        %536 = vmatpush1.msra.mxu0 %v513
        %537 = vmatprep.subr.mxu0 %v516
        %538 = vmatpush1.msra.mxu0 %v515
        %539 = vmatprep.subr.mxu0 %v518
        %540 = vmatpush1.msra.mxu0 %v517
        %541 = vmatprep.subr.mxu0 %v520
        %542 = vmatpush1.msra.mxu0 %v519
        %543 = vmatprep.subr.mxu0 %v522
        %544 = vmatpush1.msra.mxu0 %v521
        %545 = vmatprep.subr.mxu0 %v524
        %546 = vmatpush1.msra.mxu0 %v523
        %547 = vmatprep.subr.mxu0 %v526
        %548 = vmatpush1.msra.mxu0 %v525
        %549 = vmatprep.subr.mxu0 %v528
        %550 = vmatpush1.msra.mxu0 %v527
        %551 = vmatprep.subr.mxu0 %v530
        %552 = vmatpush1.msra.mxu0 %v529
        %553 = vmatprep.subr.mxu0 0.0
        %554 = vmatpush1.msra.mxu0 0.0
        %555 = vmatprep.subr.mxu0 0.0
        %556 = vmatpush1.msra.mxu0 0.0
        %557 = vmatprep.subr.mxu0 0.0
        %558 = vmatpush1.msra.mxu0 0.0
        %559 = vmatprep.subr.mxu0 0.0
        %560 = vmatpush1.msra.mxu0 0.0
        %561 = vmatprep.subr.mxu0 0.0
        %562 = vmatpush1.msra.mxu0 0.0
        %563 = vmatprep.subr.mxu0 0.0
        %564 = vmatpush1.msra.mxu0 0.0
        %565 = vmatprep.subr.mxu0 0.0
        %566 = vmatpush1.msra.mxu0 0.0
        %567 = vmatprep.subr.mxu0 0.0
        %568 = vmatpush1.msra.mxu0 0.0
        %569 = vmatprep.subr.mxu0 0.0
        %570 = vmatpush1.msra.mxu0 0.0
        %571 = vmatprep.subr.mxu0 0.0
        %572 = vmatpush1.msra.mxu0 0.0
        %573 = vmatprep.subr.mxu0 0.0
        %574 = vmatpush1.msra.mxu0 0.0
        %575 = vmatprep.subr.mxu0 0.0
        %576 = vmatpush1.msra.mxu0 0.0
        %577 = vmatprep.subr.mxu0 0.0
        %578 = vmatpush1.msra.mxu0 0.0
        %579 = vmatprep.subr.mxu0 0.0
        %580 = vmatpush1.msra.mxu0 0.0
        %581 = vmatprep.subr.mxu0 0.0
        %582 = vmatpush1.msra.mxu0 0.0
        %583 = vmatprep.subr.mxu0 0.0
        %584 = vmatpush1.msra.mxu0 0.0
        %585 = vmatprep.subr.mxu0 0.0
        %586 = vmatpush1.msra.mxu0 0.0
        %587 = vmatprep.subr.mxu0 0.0
        %588 = vmatpush1.msra.mxu0 0.0
        %589 = vmatprep.subr.mxu0 0.0
        %590 = vmatpush1.msra.mxu0 0.0
        %591 = vmatprep.subr.mxu0 0.0
        %592 = vmatpush1.msra.mxu0 0.0
        %593 = vmatprep.subr.mxu0 0.0
        %594 = vmatpush1.msra.mxu0 0.0
        %595 = vmatprep.subr.mxu0 0.0
        %596 = vmatpush1.msra.mxu0 0.0
        %597 = vmatprep.subr.mxu0 0.0
        %598 = vmatpush1.msra.mxu0 0.0
        %599 = vmatprep.mubr.f32.mxu0 0.0
        %600 = vmatmul.mubr.f32.gmra.mrb[0].mxu0 %v533
        %v601 = vpop.f32.mrb[0].mxu0
        %v602 = vadd.f32 0.0, %v601
        %v603 = vpop.f32.mrb[0].mxu0
        %v604 = vadd.f32 0.0, %v603
        %605 = vdwg.mxu0
        %606 = vst [vmem:[%s262] sm:$0xff] %v602
        %607 = vst [vmem:[%s262 + $0x8] sm:$0xff] %v604
        %v608 = vadd.f32 %v602, %v604
        %609 = vadd.xlane.f32.xlu0 %v608
        %v610 = vpop.xlane.xlu0 %609
        %vm611 = vcmask 7168
        %612 = vst.msk [vmem:[%s269] sm:$0xff] %vm611, %v610
        %v613 = vmul.f32 %v602, %v602
        %v614 = vmul.f32 %v604, %v604
        %v615 = vadd.f32 %v613, %v614
        %616 = vadd.xlane.f32.xlu0 %v615
        %v617 = vpop.xlane.xlu0 %616
        %vm618 = vcmask 15368
        %619 = vst.msk [vmem:[%s269] sm:$0xff] %vm618, %v617
        %s620 = sand.u32 %s118, 1
        %s621 = scalar_lea.sflag [#allocation5], %s620
        %s622 = sand.u32 %s118, 1
        %s623 = smul.addr %s622, 16
        %s624 = scalar_lea.vmem [#allocation9], %s623
        %s625 = sand.u32 %s146, 1
        %s626 = scalar_lea.sflag [#allocation11], %s625
        %s627 = sand.u32 %s146, 1
        %s628 = smul.addr %s627, 8
        %s629 = scalar_lea.vmem [#allocation10], %s628
        // Predicated region
        $region45: #{_unet_up_forward.2} parent=31 // pred_check
          %p630 = pneg %p128
        $region46: #{_unet_up_forward.2} parent=31 // pred_check_branch
          %632 = sbr.rel (%p630) target = $region48
        $region47: #{_unet_up_forward.2} parent=31 // pred_region
          %s633 = smul.u32 2, %s31
          %s635 = ssub.s32 256, 256
          %636 = vsyncadd %s621, %s635
          %s637 = smul.addr %s30, 2
          %s638 = sadd.s32 %s633, %s637
          %s639 = smul.addr %s638, 128
          %s640 = scalar_lea.hbm %s3, %s639
          %s642 = sshll.u32 %s624, 4
          %s643 = int_to_ptr.vmem [resolvable:$true] %s642
          %645 = dma.vmem_to_hbm [thread:$0]  %s643, 256, %s640, %s621
        $region48: #{_unet_up_forward.2} parent=31 // pred_fallthru
          _
        // Predicated region
        $region49: #{_unet_up_forward.2} parent=31 // pred_check
          %p646 = pneg %p156
        $region50: #{_unet_up_forward.2} parent=31 // pred_check_branch
          %648 = sbr.rel (%p646) target = $region52
        $region51: #{_unet_up_forward.2} parent=31 // pred_region
          %s650 = ssub.s32 128, 128
          %651 = vsyncadd %s626, %s650
          %s652 = sadd.s32 %s31, %s30
          %s653 = smul.addr %s652, 128
          %s654 = scalar_lea.hbm %s4, %s653
          %s656 = sshll.u32 %s629, 4
          %s657 = int_to_ptr.vmem [resolvable:$true] %s656
          %659 = dma.vmem_to_hbm [thread:$0]  %s657, 128, %s654, %s626
        $region52: #{_unet_up_forward.2} parent=31 // pred_fallthru
          _
      $region32: #{_unet_up_forward.2} parent=5 // pred_fallthru
        _
      %p660 = scmp.le.s32.totalorder 2, %s21
      // Predicated region
      $region53: #{_unet_up_forward.2} parent=5 // pred_check
        %p661 = pneg %p660
      $region54: #{_unet_up_forward.2} parent=5 // pred_check_branch
        %663 = sbr.rel (%p661) target = $region56
      $region55: #{_unet_up_forward.2} parent=5 // pred_region
        %s664 = ssub.s32 %s21, 2
        // Predicated region
        $region57: #{_unet_up_forward.2} parent=55 // pred_check
          %p665 = pneg %p134
        $region58: #{_unet_up_forward.2} parent=55 // pred_check_branch
          %667 = sbr.rel (%p665) target = $region60
        $region59: #{_unet_up_forward.2} parent=55 // pred_region
          %s668 = sand.u32 %s119, 1
          %s669 = scalar_lea.sflag [#allocation5], %s668
          %s670 = sand.u32 %s119, 1
          %s671 = smul.addr %s670, 16
          %s672 = scalar_lea.vmem [#allocation9], %s671
          %673 = dma.done %s669, 256
        $region60: #{_unet_up_forward.2} parent=55 // pred_fallthru
          _
        // Predicated region
        $region61: #{_unet_up_forward.2} parent=55 // pred_check
          %p674 = pneg %p162
        $region62: #{_unet_up_forward.2} parent=55 // pred_check_branch
          %676 = sbr.rel (%p674) target = $region64
        $region63: #{_unet_up_forward.2} parent=55 // pred_region
          %s677 = sand.u32 %s147, 1
          %s678 = scalar_lea.sflag [#allocation11], %s677
          %s679 = sand.u32 %s147, 1
          %s680 = smul.addr %s679, 8
          %s681 = scalar_lea.vmem [#allocation10], %s680
          %682 = dma.done %s678, 128
        $region64: #{_unet_up_forward.2} parent=55 // pred_fallthru
          _
      $region56: #{_unet_up_forward.2} parent=5 // pred_fallthru
        _
    $region6: #{_unet_up_forward.2} parent=1 // loop_footer
      %s25 = sadd.s32 1, %s21
    $region7: #{_unet_up_forward.2} parent=1 // loop_footer_branch
      %20 = sbr.rel target = $region3
    $region8: #{_unet_up_forward.2} parent=1 // loop_exit
      _
    %683 = vsyncpa [#allocation4], 1
    %s684 = scalar_lea.sflag [#allocation4], 1
    %685 = vsyncpa %s684, 1
    %686 = vsyncpa [#allocation7], 1
    %687 = vsyncpa [#allocation5], 1
    %s688 = scalar_lea.sflag [#allocation5], 1
    %689 = vsyncpa %s688, 1
    %690 = vsyncpa [#allocation11], 1
    %s691 = scalar_lea.sflag [#allocation11], 1
    %692 = vsyncpa %s691, 1

</llo_original>
